<compile_context>
chip_gen: v5e
topology: v5e:2x2
jax: 0.10.0
libtpu: 0.0.40
codegen_flags: <defaults>
</compile_context>

<pallas_src>
import math

import jax
import jax.numpy as jnp
from jax.experimental import pallas as pl
from jax.experimental.pallas import tpu as pltpu


# --------------------------------------------------------------------------
# Kernel: identity copy of the current tile (the only "compute" a view
# implies when a physical copy is explicitly requested).
# --------------------------------------------------------------------------
def _copy_kernel(x_ref, o_ref):
    o_ref[...] = x_ref[...]


# --------------------------------------------------------------------------
# Shape resolution with torch.view semantics (single -1, exact divisibility).
# --------------------------------------------------------------------------
def _resolve_shape(shape, total):
    shape = tuple(int(s) for s in shape)
    if shape.count(-1) > 1:
        raise ValueError("view(): only one dimension can be inferred (-1)")
    if -1 in shape:
        known = math.prod(s for s in shape if s != -1)
        if known <= 0 or total % known != 0:
            raise ValueError(
                f"view(): cannot reshape tensor of {total} elements into {shape}")
        shape = tuple(total // known if s == -1 else s for s in shape)
    if math.prod(shape) != total:
        raise ValueError(
            f"view(): shape {shape} is invalid for input of size {total}")
    return shape


# --------------------------------------------------------------------------
# Generation-aware VMEM budget.
#   v5e / v6e : 128 MiB physical VMEM -> 16 MiB tiles, 96 MiB scoped limit
#               (bigger tiles amortize the ~0.35 us per-grid-step overhead;
#                also lifts v5e's 16 MiB scoped default).
#   v7x       : 64 MiB per TensorCore -> keep 4 MiB tiles and the scoped
#               limit well under the physical ceiling (2 in + 2 out pipeline
#               buffers = 16 MiB, headroom for compiler scratch).
# --------------------------------------------------------------------------
def _vmem_budget():
    try:
        cap = int(getattr(pltpu.get_tpu_info(), "vmem_capacity_bytes"))
    except Exception:
        cap = 64 << 20  # conservative default (v7x per-TC VMEM)
    if cap >= (128 << 20):
        tile_budget = 16 << 20
        vmem_limit = min(cap - (16 << 20), 6 * tile_budget)   # 96 MiB
    else:
        tile_budget = 4 << 20
        vmem_limit = min(cap // 2, 40 << 20)                  # <= 32-40 MiB
    return tile_budget, vmem_limit


# --------------------------------------------------------------------------
# Pick a lane-dense slab (rows, cols) and a block row count.
#
# cols is kept as wide as possible (multiple of 128, preferably 2048) because
# lane-dense output width is the biggest single store-path lever.  block_rows
# is a power-of-two multiple of the dtype's sublane packing that (a) fits the
# per-tile VMEM budget and (b) keeps at least `min_steps` grid steps so the
# in/out DMAs overlap across iterations and v7x can shard the parallel axis
# across both TensorCores (best-effort even step count).  The grid uses
# pl.cdiv, so rows need not divide evenly -- Pallas masks the ragged tail.
# Returns None only if `total` has no multiple-of-128 factorization at all.
# --------------------------------------------------------------------------
def _pick_slab(total, itemsize, tile_budget, min_steps=4):
    row_mult = max(8, 8 * (4 // max(1, itemsize)))  # f32:8, bf16:16, int8:32
    for cols in (2048, 1024, 512, 256, 128):
        if total % cols:
            continue
        rows = total // cols
        cap_rows = (tile_budget // (cols * itemsize)) // row_mult * row_mult
        if cap_rows < row_mult:
            continue  # this width cannot fit even one minimal block; go narrower
        if rows <= row_mult:
            # Tiny slab: one full-extent block (block == full array dims).
            return rows, cols, rows
        # Grow block_rows (power-of-two multiples of row_mult) while it still
        # fits the tile budget AND keeps >= min_steps grid steps.
        block_rows = row_mult
        while (block_rows * 2 <= cap_rows
               and pl.cdiv(rows, block_rows * 2) >= min_steps):
            block_rows *= 2
        # Best-effort even grid length so dimension_semantics=("parallel",)
        # splits cleanly across v7x's two TensorCores.
        steps = pl.cdiv(rows, block_rows)
        if steps % 2 and block_rows > row_mult:
            half = block_rows // 2
            if pl.cdiv(rows, half) % 2 == 0:
                block_rows = half
        return rows, cols, block_rows
    return None


# --------------------------------------------------------------------------
# Explicit copy path (benchmarking only): big lane-dense tiles, ragged tail
# masked by Pallas, >= 4 pipelined grid steps whenever the slab is big enough.
# --------------------------------------------------------------------------
def _reshape_via_copy_kernel(x, shape):
    total = x.size
    itemsize = x.dtype.itemsize
    tile_budget, vmem_limit = _vmem_budget()
    plan = _pick_slab(total, itemsize, tile_budget)
    if plan is None:
        # No multiple-of-128 factorization: a kernel copy would need pad +
        # slice passes (~3x HBM traffic), strictly worse than the metadata-only
        # reshape.  NOTE: no kernel runs on this path.
        return x.reshape(shape)

    rows, cols, block_rows = plan
    grid_steps = pl.cdiv(rows, block_rows)
    slab = x.reshape(rows, cols)  # metadata only (row-major contiguous)

    # NOTE: pipeline_mode=pl.Buffered(3) on the input spec is a possible small
    # further win once grid_steps >= 4; sweep on hardware before enabling.
    out_slab = pl.pallas_call(
        _copy_kernel,
        out_shape=jax.ShapeDtypeStruct((rows, cols), x.dtype),
        grid_spec=pltpu.PrefetchScalarGridSpec(
            num_scalar_prefetch=0,
            grid=(grid_steps,),
            in_specs=[pl.BlockSpec((block_rows, cols), lambda i: (i, 0))],
            out_specs=pl.BlockSpec((block_rows, cols), lambda i: (i, 0)),
        ),
        compiler_params=pltpu.CompilerParams(
            dimension_semantics=("parallel",),
            vmem_limit_bytes=vmem_limit,
        ),
        cost_estimate=pl.CostEstimate(
            flops=0,
            transcendentals=0,
            bytes_accessed=2 * total * itemsize,
        ),
    )(slab)

    return out_slab.reshape(shape)  # metadata only


# --------------------------------------------------------------------------
# Public wrapper: equivalent of torch.Tensor.view(shape).
# --------------------------------------------------------------------------
def pallas_reshape(x, shape, *, force_copy=False):
    shape = _resolve_shape(shape, x.size)
    if not force_copy:
        # Production path: a row-major view is free metadata in XLA.
        return x.reshape(shape)
    return _reshape_via_copy_kernel(x, shape)


if __name__ == "__main__":
    key = jax.random.PRNGKey(0)
    k1, k2 = jax.random.split(key)

    # --- Test 1: spec-sized input, Reshape((2, -1)) on NCHW (2, 4, 16, 16). ---
    x = jax.random.normal(k1, (2, 4, 16, 16), dtype=jnp.float32)
    target_shape = (2, -1)  # -> (2, 1024)

    y_meta = pallas_reshape(x, target_shape)                   # zero-copy path
    y_kern = pallas_reshape(x, target_shape, force_copy=True)  # Pallas copy kernel
    y_meta, y_kern = jax.block_until_ready((y_meta, y_kern))

    y_ref = x.reshape(2, 1024)
    assert y_meta.shape == (2, 1024), y_meta.shape
    assert y_kern.shape == (2, 1024), y_kern.shape
    assert jnp.array_equal(y_meta, y_ref), "metadata path mismatch vs reference"
    assert jnp.array_equal(y_kern, y_ref), "kernel path mismatch vs reference"

    # --- Test 2: slightly larger input so the copy kernel runs a >=4-step,
    # pipelined (and v7x dual-TC shardable) grid. ---
    x2 = jax.random.normal(k2, (2, 64, 32, 32), dtype=jnp.float32)  # 512 KiB
    y2_kern = pallas_reshape(x2, (-1, 1024), force_copy=True)
    y2_kern = jax.block_until_ready(y2_kern)
    y2_ref = x2.reshape(-1, 1024)
    assert y2_kern.shape == y2_ref.shape, y2_kern.shape
    assert jnp.array_equal(y2_kern, y2_ref), "multi-step kernel path mismatch"

    print("KERNEL_OK")
</pallas_src>

<mosaic_0001>
module attributes {stable_mosaic.version = 11 : i64} {
  func.func @_copy_kernel(%arg0: i32, %arg1: memref<1x2048xf32, #tpu.memory_space<vmem>>, %arg2: memref<1x2048xf32, #tpu.memory_space<vmem>>) attributes {dimension_semantics = [#tpu.dimension_semantics<parallel>], iteration_bounds = array<i64: 1>, scalar_prefetch = 0 : i64, scratch_operands = 0 : i64, tpu.core_type = #tpu.core_type<tc>, window_params = [{transform_indices = @transform_0, window_bounds = array<i64: 1, 2048>}, {transform_indices = @transform_1, window_bounds = array<i64: 1, 2048>}]} {
    %c0 = arith.constant 0 : index
    %c0_0 = arith.constant 0 : index
    %0 = vector.load %arg1[%c0, %c0_0] : memref<1x2048xf32, #tpu.memory_space<vmem>>, vector<1x2048xf32>
    %c0_1 = arith.constant 0 : index
    %c0_2 = arith.constant 0 : index
    %1 = vector.load %arg2[%c0_1, %c0_2] : memref<1x2048xf32, #tpu.memory_space<vmem>>, vector<1x2048xf32>
    tpu.vector_store %arg2[%c0_1, %c0_2], %0 {strides = array<i32>} : memref<1x2048xf32, #tpu.memory_space<vmem>>, vector<1x2048xf32>,
    return
  }
  func.func @transform_0(%arg0: i32) -> (i32, i32) {
    %c0_i32 = arith.constant 0 : i32
    %c0_i32_0 = arith.constant 0 : i32
    return %arg0, %c0_i32 : i32, i32
  }
  func.func @transform_1(%arg0: i32) -> (i32, i32) {
    %c0_i32 = arith.constant 0 : i32
    %c0_i32_0 = arith.constant 0 : i32
    return %arg0, %c0_i32 : i32, i32
  }
}

</mosaic_0001>

<llo_original>
// kernel: tpu_custom_call.1
$region0: #{tpu_custom_call.1}
  #allocation0 [shape = 'u32[]', space=smem, size = 0x4, offset = 0x4, fixed_abs, tag = 'smem constant byte address 0x4 - core index']
  #allocation1 [shape = 'u32[72,128]{1,0:T(1,128)}', space=vmem, size = 0x9000, scoped, tag = 'internal scratch']
  %s0 = inlined_call_operand.hbm [shape: f32[1,2048], index: 0, kind: input, shape index: {}]
  %s1 = inlined_call_operand.hbm [shape: f32[1,2048], index: 1, kind: output, shape index: {}]
  %s2 = sld [smem:[#allocation0]]
  $region18: #{tpu_custom_call.1} parent=0
    _
  %s4 = ssub.s32 1, %s2
  %s5 = scalar_select 0, %s4, %s2
  $region1: #{tpu_custom_call.1} parent=0
    #allocation2 [shape = 'u8[8192]{0}', space=vmem, size = 0x2000, scoped, tag = 'input window, operand 0, single buffered']
    #allocation3 [shape = 's32[1]{0}', space=sflag, size = 0x4, scoped, tag = 'scoped memory for tpu_custom_call.1']
    #allocation4 [shape = 's32[1]{0}', space=sflag, size = 0x4, scoped, tag = 'scoped memory for tpu_custom_call.1']
    #allocation5 [shape = 'u8[8192]{0}', space=vmem, size = 0x2000, scoped, tag = 'output window, operand 0, single buffered']
    %6 = vsyncpa [#allocation3], 0
    %7 = vsyncpa [#allocation4], 0
    // Predicated region
    $region2: #{tpu_custom_call.1} parent=1 // pred_check
      _
    $region3: #{tpu_custom_call.1} parent=1 // pred_check_branch
      %9 = sbr.rel (0) target = $region5
    $region4: #{tpu_custom_call.1} parent=1 // pred_region
      %11 = vsyncadd [#allocation3], 0
      %s13 = sshll.u32 %s0, 4
      %s14 = int_to_ptr.hbm [resolvable:$true] %s13
      %s15 = sshll.u32 [#allocation2], 4
      %s16 = int_to_ptr.vmem [resolvable:$true] %s15
      %18 = dma.hbm_to_vmem [thread:$0]  %s14, 256, %s16, [#allocation3]
    $region5: #{tpu_custom_call.1} parent=1 // pred_fallthru
      _
    // Predicated region
    $region6: #{tpu_custom_call.1} parent=1 // pred_check
      _
    $region7: #{tpu_custom_call.1} parent=1 // pred_check_branch
      %20 = sbr.rel (0) target = $region9
    $region8: #{tpu_custom_call.1} parent=1 // pred_region
      %22 = dma.done [#allocation3], 256
    $region9: #{tpu_custom_call.1} parent=1 // pred_fallthru
      _
    %v23 = vld [vmem:[#allocation2] sm:$0xff]
    %v24 = vld [vmem:[#allocation2 + $0x8] sm:$0xff]
    %25 = vst [vmem:[#allocation5] sm:$0xff] %v23
    %26 = vst [vmem:[#allocation5 + $0x8] sm:$0xff] %v24
    // Predicated region
    $region10: #{tpu_custom_call.1} parent=1 // pred_check
      _
    $region11: #{tpu_custom_call.1} parent=1 // pred_check_branch
      %28 = sbr.rel (0) target = $region13
    $region12: #{tpu_custom_call.1} parent=1 // pred_region
      %30 = vsyncadd [#allocation4], 0
      %s32 = sshll.u32 [#allocation5], 4
      %s33 = int_to_ptr.vmem [resolvable:$true] %s32
      %s34 = sshll.u32 %s1, 4
      %s35 = int_to_ptr.hbm [resolvable:$true] %s34
      %37 = dma.vmem_to_hbm [thread:$0]  %s33, 256, %s35, [#allocation4]
    $region13: #{tpu_custom_call.1} parent=1 // pred_fallthru
      _
    // Predicated region
    $region14: #{tpu_custom_call.1} parent=1 // pred_check
      _
    $region15: #{tpu_custom_call.1} parent=1 // pred_check_branch
      %39 = sbr.rel (0) target = $region17
    $region16: #{tpu_custom_call.1} parent=1 // pred_region
      %41 = dma.done [#allocation4], 256
    $region17: #{tpu_custom_call.1} parent=1 // pred_fallthru
      _
    %42 = vsyncpa [#allocation3], 1
    %43 = vsyncpa [#allocation4], 1

</llo_original>
